<compile_context>
chip_gen: v7x
topology: tpu7x:2x2x1
jax: 0.10.0
libtpu: 0.0.40
codegen_flags: <defaults>
</compile_context>

<pallas_src>
import functools

import jax
import jax.numpy as jnp
from jax import lax
from jax.experimental import pallas as pl
from jax.experimental.pallas import tpu as pltpu


# --------------------------------------------------------------------------
# Kernels
# --------------------------------------------------------------------------

def _linear_f32_kernel(x_ref, w_ref, b_ref, o_ref):
    """3-D grid, f32 output: accumulate directly into the resident o_ref."""
    k = pl.program_id(2)
    acc = lax.dot_general(
        x_ref[...], w_ref[...],
        dimension_numbers=(((1,), (1,)), ((), ())),
        preferred_element_type=jnp.float32,
    )

    @pl.when(k == 0)
    def _():
        o_ref[...] = acc

    @pl.when(k != 0)
    def _():
        o_ref[...] += acc

    @pl.when(k == pl.num_programs(2) - 1)
    def _():
        o_ref[...] += b_ref[...]          # f32 bias added to f32 accumulator


def _linear_acc_kernel(x_ref, w_ref, b_ref, o_ref, acc_ref):
    """3-D grid, sub-f32 output: f32 VMEM scratch accumulator."""
    k = pl.program_id(2)

    @pl.when(k == 0)
    def _():
        acc_ref[...] = jnp.zeros_like(acc_ref)

    acc_ref[...] += lax.dot_general(
        x_ref[...], w_ref[...],
        dimension_numbers=(((1,), (1,)), ((), ())),
        preferred_element_type=jnp.float32,
    )

    @pl.when(k == pl.num_programs(2) - 1)
    def _():
        o_ref[...] = (acc_ref[...] + b_ref[...]).astype(o_ref.dtype)


def _linear_resident_kernel(x_ref, w_ref, b_ref, o_ref):
    """1-D grid over row tiles; W block index is constant -> weight resident."""
    acc = lax.dot_general(
        x_ref[...], w_ref[...],
        dimension_numbers=(((1,), (1,)), ((), ())),
        preferred_element_type=jnp.float32,
    )
    o_ref[...] = (acc + b_ref[...]).astype(o_ref.dtype)


# --------------------------------------------------------------------------
# Tile selection helpers
# --------------------------------------------------------------------------

def _pick_tile(dim, target, align):
    """Full extent if the dim is small, else an `align`-multiple <= target."""
    if dim <= target:
        return dim
    return max((target // align) * align, align)


def _pick_k_tile(in_dim, target):
    """K tile that is either the full in_dim or a 128-multiple dividing in_dim.

    Guarantees the reduction axis has no padded tail (no garbage accumulated).
    """
    if in_dim <= target or in_dim % 128 != 0:
        return in_dim                       # single K step, full extent
    units = in_dim // 128
    for d in range(min(units, max(target // 128, 1)), 0, -1):
        if units % d == 0:
            return 128 * d
    return in_dim


def _physical_vmem_bytes():
    try:
        return int(pltpu.get_tpu_info().vmem_capacity_bytes)
    except Exception:
        return 64 * 1024 * 1024             # conservative (v7x per-TC) fallback


# --------------------------------------------------------------------------
# pallas_call wrapper
# --------------------------------------------------------------------------

def _linear_pallas(x, weight, bias, *, tile_n, tile_out, tile_k,
                   allow_weight_resident=True):
    n, in_dim = x.shape
    out_dim = weight.shape[0]
    out_dtype = x.dtype

    if weight.dtype != x.dtype:
        # TODO(synk): cast the weight once at parameter setup instead of
        # paying a full HBM read+write convert on every forward.
        weight = weight.astype(x.dtype)
    b2 = bias.reshape(1, out_dim).astype(jnp.float32)   # f32 bias, f32 add

    x_isz = jnp.dtype(x.dtype).itemsize
    w_isz = jnp.dtype(weight.dtype).itemsize
    o_isz = jnp.dtype(out_dtype).itemsize
    sublane = {4: 8, 2: 16, 1: 32}.get(x_isz, 8)

    vmem_phys = _physical_vmem_bytes()
    vmem_budget = vmem_phys - 16 * 1024 * 1024           # headroom for Mosaic

    cost = pl.CostEstimate(
        flops=2 * n * in_dim * out_dim,
        transcendentals=0,
        bytes_accessed=(n * in_dim * x_isz + out_dim * in_dim * w_isz
                        + out_dim * 4 + n * out_dim * o_isz),
    )

    # ---------------- Weight-resident fast path -------------------------
    # HBM traffic collapses to x + y; the only way to approach MXU peak for
    # a plain linear.  Gated on the chip's real VMEM (2x counted for the
    # weight buffer to stay safe under Pallas double-buffering).
    tn_r = _pick_tile(n, tile_n, sublane)
    resident_bytes = (2 * (tn_r * in_dim * x_isz
                           + out_dim * in_dim * w_isz
                           + out_dim * 4)
                      + 2 * tn_r * out_dim * o_isz)
    if allow_weight_resident and resident_bytes <= vmem_budget:
        compiler_kwargs = dict(dimension_semantics=("parallel",))
        if resident_bytes > 16 * 1024 * 1024:
            compiler_kwargs["vmem_limit_bytes"] = min(
                int(resident_bytes * 5 // 4) + (1 << 20), vmem_budget)
        return pl.pallas_call(
            _linear_resident_kernel,
            out_shape=jax.ShapeDtypeStruct((n, out_dim), out_dtype),
            grid_spec=pltpu.PrefetchScalarGridSpec(
                num_scalar_prefetch=0,
                grid=(pl.cdiv(n, tn_r),),
                in_specs=[
                    pl.BlockSpec((tn_r, in_dim), lambda i: (i, 0)),      # x
                    pl.BlockSpec((out_dim, in_dim), lambda i: (0, 0)),   # W (resident)
                    pl.BlockSpec((1, out_dim), lambda i: (0, 0)),        # bias (f32)
                ],
                out_specs=pl.BlockSpec((tn_r, out_dim), lambda i: (i, 0)),
            ),
            compiler_params=pltpu.CompilerParams(**compiler_kwargs),
            cost_estimate=cost,
        )(x, weight, b2)

    # ---------------- Tiled 3-D streaming path --------------------------
    tn = _pick_tile(n, tile_n, sublane)
    to = _pick_tile(out_dim, tile_out, 128)
    tk = _pick_k_tile(in_dim, tile_k)        # exact divisor -> no K tail
    grid = (pl.cdiv(n, tn), pl.cdiv(out_dim, to), pl.cdiv(in_dim, tk))

    use_scratch = jnp.dtype(out_dtype) != jnp.dtype(jnp.float32)
    vmem_bytes = (2 * (tn * tk * x_isz + to * tk * w_isz + to * 4)
                  + 2 * tn * to * o_isz
                  + (tn * to * 4 if use_scratch else 0))
    compiler_kwargs = dict(
        dimension_semantics=("parallel", "parallel", "arbitrary"))
    if vmem_bytes > 16 * 1024 * 1024:
        compiler_kwargs["vmem_limit_bytes"] = min(
            int(vmem_bytes * 5 // 4) + (1 << 20), vmem_budget)

    kernel = _linear_acc_kernel if use_scratch else _linear_f32_kernel
    scratch = [pltpu.VMEM((tn, to), jnp.float32)] if use_scratch else []

    return pl.pallas_call(
        kernel,
        out_shape=jax.ShapeDtypeStruct((n, out_dim), out_dtype),
        grid_spec=pltpu.PrefetchScalarGridSpec(
            num_scalar_prefetch=0,
            grid=grid,
            in_specs=[
                pl.BlockSpec((tn, tk), lambda i, j, k: (i, k)),   # x
                pl.BlockSpec((to, tk), lambda i, j, k: (j, k)),   # W (native layout)
                pl.BlockSpec((1, to), lambda i, j, k: (0, j)),    # bias (f32)
            ],
            out_specs=pl.BlockSpec((tn, to), lambda i, j, k: (i, j)),
            scratch_shapes=scratch,
        ),
        compiler_params=pltpu.CompilerParams(**compiler_kwargs),
        cost_estimate=cost,
    )(x, weight, b2)


# --------------------------------------------------------------------------
# Module forward
# --------------------------------------------------------------------------

def leaf_module_forward(reduced_coord, reduced_feat, reduced_sep, weight, bias,
                        *, tile_n=1024, tile_out=512, tile_k=512,
                        allow_weight_resident=True, force_pallas=False):
    """Pallas implementation of LeafModule.forward.

    reduced_coord / reduced_sep are accepted and ignored (as in the module).
    reduced_feat: [..., in_dim]
    weight:       [out_dim, in_dim]   (PyTorch nn.Linear / te.Linear layout)
    bias:         [out_dim]
    returns:      [..., out_dim]
    """
    del reduced_coord, reduced_sep  # ignored by the module
    orig_shape = reduced_feat.shape
    in_dim = orig_shape[-1]
    out_dim = weight.shape[0]

    x = reduced_feat.reshape(-1, in_dim)  # glue: flatten leading dims
    n = x.shape[0]

    # Tiny problems: a fused XLA dot beats the pallas_call launch overhead.
    if not force_pallas and n * in_dim * out_dim < 10_000_000:
        out = (x @ weight.T.astype(x.dtype)
               + bias.astype(jnp.float32)).astype(x.dtype)
    else:
        out = _linear_pallas(
            x, weight, bias,
            tile_n=tile_n, tile_out=tile_out, tile_k=tile_k,
            allow_weight_resident=allow_weight_resident)

    return out.reshape(*orig_shape[:-1], out_dim)


# --------------------------------------------------------------------------
# Self-test
# --------------------------------------------------------------------------

if __name__ == "__main__":
    key = jax.random.PRNGKey(0)
    k_feat, k_coord, k_w, k_b = jax.random.split(key, 4)

    # ----- Test 1: module-shaped small inputs (weight-resident path) -----
    batch, seq, in_dim, out_dim = 2, 8, 32, 32

    reduced_coord = jax.random.normal(k_coord, (batch, seq, 3), jnp.float32)
    reduced_feat = jax.random.normal(k_feat, (batch, seq, in_dim), jnp.float32)
    reduced_sep = jnp.arange(batch * seq, dtype=jnp.int32).reshape(batch, seq)

    weight = jax.random.normal(k_w, (out_dim, in_dim), jnp.float32) * 0.02
    bias = jax.random.normal(k_b, (out_dim,), jnp.float32) * 0.02

    fwd = jax.jit(functools.partial(leaf_module_forward, force_pallas=True))
    y = jax.block_until_ready(
        fwd(reduced_coord, reduced_feat, reduced_sep, weight, bias))

    y_ref = reduced_feat @ weight.T + bias
    assert y.shape == (batch, seq, out_dim)
    assert jnp.allclose(y, y_ref, atol=1e-4, rtol=1e-4)

    # ----- Test 2: exercise the tiled 3-D reduction path (small tiles) -----
    n2, in2, out2 = 32, 256, 256
    x2 = jax.random.normal(k_feat, (n2, in2), jnp.float32)
    w2 = jax.random.normal(k_w, (out2, in2), jnp.float32) * 0.02
    b2v = jax.random.normal(k_b, (out2,), jnp.float32) * 0.02

    fwd2 = jax.jit(functools.partial(
        leaf_module_forward, force_pallas=True, allow_weight_resident=False,
        tile_n=16, tile_out=128, tile_k=128))
    y2 = jax.block_until_ready(fwd2(None, x2, None, w2, b2v))

    y2_ref = x2 @ w2.T + b2v
    assert y2.shape == (n2, out2)
    assert jnp.allclose(y2, y2_ref, atol=1e-3, rtol=1e-3)

    print("KERNEL_OK")
</pallas_src>

<mosaic_0001>
module attributes {stable_mosaic.version = 11 : i64} {
  func.func @_linear_resident_kernel(%arg0: i32, %arg1: memref<16x32xf32, #tpu.memory_space<vmem>>, %arg2: memref<32x32xf32, #tpu.memory_space<vmem>>, %arg3: memref<1x32xf32, #tpu.memory_space<vmem>>, %arg4: memref<16x32xf32, #tpu.memory_space<vmem>>) attributes {dimension_semantics = [#tpu.dimension_semantics<parallel>], iteration_bounds = array<i64: 1>, scalar_prefetch = 0 : i64, scratch_operands = 0 : i64, tpu.core_type = #tpu.core_type<tc>, window_params = [{transform_indices = @transform_0, window_bounds = array<i64: 16, 32>}, {pipeline_mode = #tpu.pipeline_mode<synchronous>, transform_indices = @transform_1, window_bounds = array<i64: 32, 32>}, {pipeline_mode = #tpu.pipeline_mode<synchronous>, transform_indices = @transform_2, window_bounds = array<i64: 1, 32>}, {transform_indices = @transform_3, window_bounds = array<i64: 16, 32>}]} {
    %c0 = arith.constant 0 : index
    %c0_0 = arith.constant 0 : index
    %0 = vector.load %arg1[%c0, %c0_0] : memref<16x32xf32, #tpu.memory_space<vmem>>, vector<16x32xf32>
    %c0_1 = arith.constant 0 : index
    %c0_2 = arith.constant 0 : index
    %1 = vector.load %arg2[%c0_1, %c0_2] : memref<32x32xf32, #tpu.memory_space<vmem>>, vector<32x32xf32>
    %cst = arith.constant dense<0.000000e+00> : vector<16x32xf32>
    %2 = tpu.matmul %0, %1, %cst {dimension_numbers = #tpu.dot_dimension_numbers<[1], [1], [0], [0], [0, 0, 1, 0], [], []>} : vector<16x32xf32>, vector<32x32xf32>, vector<16x32xf32> -> vector<16x32xf32>
    %c0_3 = arith.constant 0 : index
    %c0_4 = arith.constant 0 : index
    %3 = vector.load %arg3[%c0_3, %c0_4] : memref<1x32xf32, #tpu.memory_space<vmem>>, vector<1x32xf32>
    %4 = vector.broadcast %3 : vector<1x32xf32> to vector<16x32xf32>
    %5 = arith.addf %2, %4 : vector<16x32xf32>
    %c0_5 = arith.constant 0 : index
    %c0_6 = arith.constant 0 : index
    %6 = vector.load %arg4[%c0_5, %c0_6] : memref<16x32xf32, #tpu.memory_space<vmem>>, vector<16x32xf32>
    tpu.vector_store %arg4[%c0_5, %c0_6], %5 {strides = array<i32>} : memref<16x32xf32, #tpu.memory_space<vmem>>, vector<16x32xf32>,
    return
  }
  func.func @transform_0(%arg0: i32) -> (i32, i32) {
    %c0_i32 = arith.constant 0 : i32
    %c0_i32_0 = arith.constant 0 : i32
    return %arg0, %c0_i32 : i32, i32
  }
  func.func @transform_1(%arg0: i32) -> (i32, i32) {
    %c0_i32 = arith.constant 0 : i32
    %c0_i32_0 = arith.constant 0 : i32
    %c0_i32_1 = arith.constant 0 : i32
    return %c0_i32, %c0_i32_0 : i32, i32
  }
  func.func @transform_2(%arg0: i32) -> (i32, i32) {
    %c0_i32 = arith.constant 0 : i32
    %c0_i32_0 = arith.constant 0 : i32
    %c0_i32_1 = arith.constant 0 : i32
    return %c0_i32, %c0_i32_0 : i32, i32
  }
  func.func @transform_3(%arg0: i32) -> (i32, i32) {
    %c0_i32 = arith.constant 0 : i32
    %c0_i32_0 = arith.constant 0 : i32
    return %arg0, %c0_i32 : i32, i32
  }
}

</mosaic_0001>

<llo_original>
// kernel: leaf_module_forward.1
$region0: #{leaf_module_forward.1}
  #allocation0 [shape = 'u32[]', space=smem, size = 0x4, offset = 0x4, fixed_abs, tag = 'smem constant byte address 0x4 - core index']
  #allocation1 [shape = 'u32[144,128]{1,0:T(1,128)}', space=vmem, size = 0x12000, scoped, tag = 'internal scratch']
  %s0 = inlined_call_operand.hbm [shape: f32[16,32], index: 0, kind: input, shape index: {}]
  %s1 = inlined_call_operand.hbm [shape: f32[32,32], index: 1, kind: input, shape index: {}]
  %s2 = inlined_call_operand.vmem [shape: f32[1,32], index: 2, kind: input, shape index: {}]
  %s3 = inlined_call_operand.hbm [shape: f32[16,32], index: 3, kind: output, shape index: {}]
  %s4 = sld [smem:[#allocation0]]
  $region30: #{leaf_module_forward.1} parent=0
    _
  %s6 = ssub.s32 1, %s4
  %s7 = scalar_select 0, %s6, %s4
  $region1: #{leaf_module_forward.1} parent=0
    #allocation2 [shape = 'u8[8192]{0}', space=vmem, size = 0x2000, scoped, tag = 'input window, operand 0, single buffered']
    #allocation3 [shape = 's32[1]{0}', space=sflag, size = 0x4, scoped, tag = 'scoped memory for leaf_module_forward.1']
    #allocation4 [shape = 's32[1]{0}', space=sflag, size = 0x4, scoped, tag = 'scoped memory for leaf_module_forward.1']
    #allocation5 [shape = 'u8[16384]{0}', space=vmem, size = 0x4000, scoped, tag = 'input window, operand 1, single buffered']
    #allocation6 [shape = 's32[1]{0}', space=sflag, size = 0x4, scoped, tag = 'scoped memory for leaf_module_forward.1']
    #allocation7 [shape = 'u8[8192]{0}', space=vmem, size = 0x2000, scoped, tag = 'output window, operand 0, single buffered']
    %8 = vsyncpa [#allocation3], 0
    %9 = vsyncpa [#allocation6], 0
    %10 = vsyncpa [#allocation4], 0
    // Predicated region
    $region2: #{leaf_module_forward.1} parent=1 // pred_check
      _
    $region3: #{leaf_module_forward.1} parent=1 // pred_check_branch
      %12 = sbr.rel (0) target = $region5
    $region4: #{leaf_module_forward.1} parent=1 // pred_region
      %s14 = ssub.s32 256, 256
      %15 = vsyncadd [#allocation3], %s14
      %s16 = sshll.u32 [#allocation2], 4
      %s17 = int_to_ptr.vmem [resolvable:$true] %s16
      %22 = dma.hbm_to_vmem [thread:$0]  %s0, 256, %s17, [#allocation3], 128, 128, 8
    $region5: #{leaf_module_forward.1} parent=1 // pred_fallthru
      _
    // Predicated region
    $region6: #{leaf_module_forward.1} parent=1 // pred_check
      _
    $region7: #{leaf_module_forward.1} parent=1 // pred_check_branch
      %24 = sbr.rel (0) target = $region9
    $region8: #{leaf_module_forward.1} parent=1 // pred_region
      %s26 = ssub.s32 512, 512
      %27 = vsyncadd [#allocation6], %s26
      %s28 = sshll.u32 [#allocation5], 4
      %s29 = int_to_ptr.vmem [resolvable:$true] %s28
      %34 = dma.hbm_to_vmem [thread:$0]  %s1, 512, %s29, [#allocation6], 128, 128, 8
    $region9: #{leaf_module_forward.1} parent=1 // pred_fallthru
      _
    // Predicated region
    $region10: #{leaf_module_forward.1} parent=1 // pred_check
      _
    $region11: #{leaf_module_forward.1} parent=1 // pred_check_branch
      %36 = sbr.rel (0) target = $region13
    $region12: #{leaf_module_forward.1} parent=1 // pred_region
      _
    $region13: #{leaf_module_forward.1} parent=1 // pred_fallthru
      _
    // Predicated region
    $region14: #{leaf_module_forward.1} parent=1 // pred_check
      _
    $region15: #{leaf_module_forward.1} parent=1 // pred_check_branch
      %38 = sbr.rel (0) target = $region17
    $region16: #{leaf_module_forward.1} parent=1 // pred_region
      %39 = dma.done [#allocation3], 256
    $region17: #{leaf_module_forward.1} parent=1 // pred_fallthru
      _
    // Predicated region
    $region18: #{leaf_module_forward.1} parent=1 // pred_check
      _
    $region19: #{leaf_module_forward.1} parent=1 // pred_check_branch
      %41 = sbr.rel (0) target = $region21
    $region20: #{leaf_module_forward.1} parent=1 // pred_region
      %42 = dma.done [#allocation6], 512
    $region21: #{leaf_module_forward.1} parent=1 // pred_fallthru
      _
    %v43 = vld [vmem:[#allocation2] sm:$0xff]
    %v44 = vld [vmem:[#allocation2 + $0x8] sm:$0xff]
    %v45 = vld [vmem:[#allocation5] sm:$0xff]
    %v46 = vld [vmem:[#allocation5 + $0x8] sm:$0xff]
    %v47 = vld [vmem:[#allocation5 + $0x10] sm:$0xff]
    %v48 = vld [vmem:[#allocation5 + $0x18] sm:$0xff]
    %v49 = vld [vmem:[%s2] sm:$0x1]
    %v51 = vlaneseq
    %v52 = vshrl.u32 %v51, 7
    %v53 = vsub.s32 0, %v52
    %v54 = vrot.slane %v49, %v53
    %vm56 = vcmask 261120
    %v58 = vsel %vm56, %v43, 0
    %v61 = vsel %vm56, %v44, 0
    %v64 = vsel %vm56, %v45, 0
    %v67 = vsel %vm56, %v46, 0
    %v70 = vsel %vm56, %v47, 0
    %v73 = vsel %vm56, %v48, 0
    %75 = vmatprep.subr.mxu0 0.0
    %76 = vmatpush1.xpose.msra.mxu0 %v64
    %77 = vmatprep.subr.mxu0 0.0
    %78 = vmatpush1.xpose.msra.mxu0 %v67
    %79 = vmatprep.subr.mxu0 0.0
    %80 = vmatpush1.xpose.msra.mxu0 %v70
    %81 = vmatprep.subr.mxu0 0.0
    %82 = vmatpush1.xpose.msra.mxu0 %v73
    %83 = vmatprep.subr.mxu0 0.0
    %84 = vmatpush1.xpose.msra.mxu0 0.0
    %85 = vmatprep.subr.mxu0 0.0
    %86 = vmatpush1.xpose.msra.mxu0 0.0
    %87 = vmatprep.subr.mxu0 0.0
    %88 = vmatpush1.xpose.msra.mxu0 0.0
    %89 = vmatprep.subr.mxu0 0.0
    %90 = vmatpush1.xpose.msra.mxu0 0.0
    %91 = vmatprep.subr.mxu0 0.0
    %92 = vmatpush1.xpose.msra.mxu0 0.0
    %93 = vmatprep.subr.mxu0 0.0
    %94 = vmatpush1.xpose.msra.mxu0 0.0
    %95 = vmatprep.subr.mxu0 0.0
    %96 = vmatpush1.xpose.msra.mxu0 0.0
    %97 = vmatprep.subr.mxu0 0.0
    %98 = vmatpush1.xpose.msra.mxu0 0.0
    %99 = vmatprep.subr.mxu0 0.0
    %100 = vmatpush1.xpose.msra.mxu0 0.0
    %101 = vmatprep.subr.mxu0 0.0
    %102 = vmatpush1.xpose.msra.mxu0 0.0
    %103 = vmatprep.subr.mxu0 0.0
    %104 = vmatpush1.xpose.msra.mxu0 0.0
    %105 = vmatprep.subr.mxu0 0.0
    %106 = vmatpush1.xpose.msra.mxu0 0.0
    %107 = vmatprep.subr.mxu0 0.0
    %108 = vmatpush1.xpose.msra.mxu0 0.0
    %109 = vmatprep.subr.mxu0 0.0
    %110 = vmatpush1.xpose.msra.mxu0 0.0
    %111 = vmatprep.subr.mxu0 0.0
    %112 = vmatpush1.xpose.msra.mxu0 0.0
    %113 = vmatprep.subr.mxu0 0.0
    %114 = vmatpush1.xpose.msra.mxu0 0.0
    %115 = vmatprep.subr.mxu0 0.0
    %116 = vmatpush1.xpose.msra.mxu0 0.0
    %117 = vmatprep.subr.mxu0 0.0
    %118 = vmatpush1.xpose.msra.mxu0 0.0
    %119 = vmatprep.subr.mxu0 0.0
    %120 = vmatpush1.xpose.msra.mxu0 0.0
    %121 = vmatprep.subr.mxu0 0.0
    %122 = vmatpush1.xpose.msra.mxu0 0.0
    %123 = vmatprep.subr.mxu0 0.0
    %124 = vmatpush1.xpose.msra.mxu0 0.0
    %125 = vmatprep.subr.mxu0 0.0
    %126 = vmatpush1.xpose.msra.mxu0 0.0
    %127 = vmatprep.subr.mxu0 0.0
    %128 = vmatpush1.xpose.msra.mxu0 0.0
    %129 = vmatprep.subr.mxu0 0.0
    %130 = vmatpush1.xpose.msra.mxu0 0.0
    %131 = vmatprep.subr.mxu0 0.0
    %132 = vmatpush1.xpose.msra.mxu0 0.0
    %133 = vmatprep.subr.mxu0 0.0
    %134 = vmatpush1.xpose.msra.mxu0 0.0
    %135 = vmatprep.subr.mxu0 0.0
    %136 = vmatpush1.xpose.msra.mxu0 0.0
    %137 = vmatprep.subr.mxu0 0.0
    %138 = vmatpush1.xpose.msra.mxu0 0.0
    %139 = vmatprep.mubr.f32.mxu0 0.0
    %140 = vmatmul.mubr.f32.gmra.mrb[0].mxu0 %v58
    %v141 = vpop.f32.mrb[0].mxu0
    %v142 = vadd.f32 %v54, %v141
    %v143 = vpop.f32.mrb[0].mxu0
    %144 = vmatprep.mubr.f32.mxu0 0.0
    %145 = vmatmul.mubr.f32.gmra.mrb[0].mxu0 %v61
    %v146 = vpop.f32.mrb[0].mxu0
    %v147 = vadd.f32 %v54, %v146
    %v148 = vpop.f32.mrb[0].mxu0
    %149 = vdwg.mxu0
    %150 = vst.msk [vmem:[#allocation7] sm:$0xff] %vm56, %v142
    %151 = vst.msk [vmem:[#allocation7 + $0x8] sm:$0xff] %vm56, %v147
    // Predicated region
    $region22: #{leaf_module_forward.1} parent=1 // pred_check
      _
    $region23: #{leaf_module_forward.1} parent=1 // pred_check_branch
      %153 = sbr.rel (0) target = $region25
    $region24: #{leaf_module_forward.1} parent=1 // pred_region
      %s155 = ssub.s32 256, 256
      %156 = vsyncadd [#allocation4], %s155
      %s157 = sshll.u32 [#allocation7], 4
      %s158 = int_to_ptr.vmem [resolvable:$true] %s157
      %163 = dma.vmem_to_hbm [thread:$0]  %s158, 256, %s3, [#allocation4], 128, 128, 8
    $region25: #{leaf_module_forward.1} parent=1 // pred_fallthru
      _
    // Predicated region
    $region26: #{leaf_module_forward.1} parent=1 // pred_check
      _
    $region27: #{leaf_module_forward.1} parent=1 // pred_check_branch
      %165 = sbr.rel (0) target = $region29
    $region28: #{leaf_module_forward.1} parent=1 // pred_region
      %166 = dma.done [#allocation4], 256
    $region29: #{leaf_module_forward.1} parent=1 // pred_fallthru
      _
    %167 = vsyncpa [#allocation3], 1
    %168 = vsyncpa [#allocation6], 1
    %169 = vsyncpa [#allocation4], 1

</llo_original>
